<compile_context>
chip_gen: v7x
topology: tpu7x:2x2x1
jax: 0.10.0
libtpu: 0.0.40
codegen_flags: <defaults>
</compile_context>

<pallas_src>
import jax
import jax.numpy as jnp
from jax.experimental import pallas as pl
from jax.experimental.pallas import tpu as pltpu


_FEATURE_SLICES = {
    "hopper": slice(-6, -3),
    "fetch": slice(0, 3),
    "fetch_push": slice(3, 5),
    "finger": slice(0, 3),
}


def _round_up(x, m):
    return ((x + m - 1) // m) * m


def _disc_fwd_kernel(x_ref, w1_ref, b1_ref, w2_ref, b2_ref, w3_ref, b3_ref,
                     out_ref):
    # Layer 1: bf16 MXU inputs, f32 accumulation, f32 bias+relu on the VPU.
    x = x_ref[...].astype(jnp.bfloat16)                          # (Bt, Dp)
    h1 = jnp.dot(x, w1_ref[...], preferred_element_type=jnp.float32)
    h1 = jnp.maximum(h1 + b1_ref[...], 0.0)                      # (Bt, 256) f32

    # Layer 2.
    h2 = jnp.dot(h1.astype(jnp.bfloat16), w2_ref[...],
                 preferred_element_type=jnp.float32)
    h2 = jnp.maximum(h2 + b2_ref[...], 0.0)                      # (Bt, 64) f32

    # Layer 3 logits.
    logits = jnp.dot(h2.astype(jnp.bfloat16), w3_ref[...],
                     preferred_element_type=jnp.float32) + b3_ref[...]

    # softmax over dim=1 (skill axis): max-shift, exp on EUP, exact reciprocal.
    m = jnp.max(logits, axis=-1, keepdims=True)
    e = jnp.exp(logits - m)
    denom = jnp.sum(e, axis=-1, keepdims=True)
    out_ref[...] = e * pl.reciprocal(denom)


def discriminator_forward(s, params, *, featurize=False, env_name=None,
                          block_b=1024):
    """Forward pass. s: (B, state_dim) float32.

    params: w{1,2,3} stored (in, out), b{1,2,3} stored (1, out). If
    featurize=True, w1's input dim must match the env's feature_dim.
    """
    x = s[:, _FEATURE_SLICES[env_name]] if featurize else s
    B, D = x.shape
    n_skill = params["w3"].shape[1]

    # Pre-cast weights once for the MXU; biases stay f32 for the VPU adds.
    w1 = params["w1"].astype(jnp.bfloat16)
    w2 = params["w2"].astype(jnp.bfloat16)
    w3 = params["w3"].astype(jnp.bfloat16)
    b1, b2, b3 = params["b1"], params["b2"], params["b3"]

    # Featurized inputs can be 2-3 wide; zero-pad the contracting dim to a
    # multiple of 8 (zero columns of x x zero rows of w1 contribute nothing).
    Dp = _round_up(D, 8)
    if Dp != D:
        x = jnp.pad(x, ((0, 0), (0, Dp - D)))
        w1 = jnp.pad(w1, ((0, Dp - D), (0, 0)))

    # Batch tile: multiple of 8 sublanes, capped at block_b rows per step.
    bt = min(block_b, _round_up(B, 8))
    grid = (pl.cdiv(B, bt),)

    flops = 2 * B * (Dp * 256 + 256 * 64 + 64 * n_skill)
    bytes_accessed = (B * Dp * 4 + B * n_skill * 4
                      + 2 * (Dp * 256 + 256 * 64 + 64 * n_skill)
                      + 4 * (256 + 64 + n_skill))

    return pl.pallas_call(
        _disc_fwd_kernel,
        grid=grid,
        in_specs=[
            pl.BlockSpec((bt, Dp), lambda i: (i, 0)),       # x: tiled over batch
            pl.BlockSpec(w1.shape, lambda i: (0, 0)),       # weights/biases resident
            pl.BlockSpec(b1.shape, lambda i: (0, 0)),
            pl.BlockSpec(w2.shape, lambda i: (0, 0)),
            pl.BlockSpec(b2.shape, lambda i: (0, 0)),
            pl.BlockSpec(w3.shape, lambda i: (0, 0)),
            pl.BlockSpec(b3.shape, lambda i: (0, 0)),
        ],
        out_specs=pl.BlockSpec((bt, n_skill), lambda i: (i, 0)),
        out_shape=jax.ShapeDtypeStruct((B, n_skill), jnp.float32),
        compiler_params=pltpu.CompilerParams(
            dimension_semantics=("parallel",)),             # v7x megacore sharding
        cost_estimate=pl.CostEstimate(
            flops=flops,
            transcendentals=B * n_skill,
            bytes_accessed=bytes_accessed),
    )(x, w1, b1, w2, b2, w3, b3)


def init_params(key, in_dim, n_skill):
    """Deterministic synthetic init; weights stored (in, out), bias (1, out)."""
    ks = jax.random.split(key, 6)
    dims = [(in_dim, 256), (256, 64), (64, n_skill)]
    params = {}
    for i, (din, dout) in enumerate(dims, start=1):
        scale = 1.0 / jnp.sqrt(din)
        params[f"w{i}"] = jax.random.uniform(ks[2 * (i - 1)], (din, dout),
                                             jnp.float32, -scale, scale)
        params[f"b{i}"] = jax.random.uniform(ks[2 * (i - 1) + 1], (1, dout),
                                             jnp.float32, -scale, scale)
    return params


def reference_forward(x, params):
    """Pure-f32 reference mirroring the PyTorch module's forward()."""
    h1 = jnp.maximum(x @ params["w1"] + params["b1"], 0.0)
    h2 = jnp.maximum(h1 @ params["w2"] + params["b2"], 0.0)
    logits = h2 @ params["w3"] + params["b3"]
    return jax.nn.softmax(logits, axis=1)


if __name__ == "__main__":
    state_dim, n_skill = 16, 8

    key = jax.random.PRNGKey(0)
    k_x, k_p, k_pf = jax.random.split(key, 3)
    params = init_params(k_p, state_dim, n_skill)

    # featurize=False path:
    #   (1) toy batch = single grid step,
    #   (2) larger batch that exercises the batch grid + resident weights,
    #   (3) batch not a multiple of the tile (nor of 8) -> masked final block.
    for B, blk in ((8, 1024), (2000, 512), (1003, 256)):
        s = jax.random.normal(jax.random.fold_in(k_x, B), (B, state_dim),
                              dtype=jnp.float32)
        out = jax.block_until_ready(discriminator_forward(s, params, block_b=blk))
        ref = reference_forward(s, params)

        assert out.shape == (B, n_skill)
        # bf16 MXU inputs (f32 accumulation) vs. pure-f32 reference: ~1e-3 level.
        err = float(jnp.max(jnp.abs(out - ref)))
        assert jnp.allclose(out, ref, atol=5e-3, rtol=0.0), err
        assert jnp.allclose(jnp.sum(out, axis=1), 1.0, atol=1e-5)

    # featurize=True path ('fetch': x = s[:, 0:3]); wrapper slices + zero-pads
    # the 3-wide feature to 8 lanes (exact), kernel is identical.
    params_f = init_params(k_pf, 3, n_skill)
    s = jax.random.normal(jax.random.fold_in(k_x, 99), (8, state_dim),
                          dtype=jnp.float32)
    out = jax.block_until_ready(
        discriminator_forward(s, params_f, featurize=True, env_name="fetch"))
    ref = reference_forward(s[:, 0:3], params_f)
    err = float(jnp.max(jnp.abs(out - ref)))
    assert out.shape == (8, n_skill)
    assert jnp.allclose(out, ref, atol=5e-3, rtol=0.0), err

    # TODO(synk): forward_vae / loss_vae / sample use torch.randn_like
    # reparameterization; only the deterministic forward() hot path is ported.
    print("KERNEL_OK")
</pallas_src>

<mosaic_0001>
module attributes {stable_mosaic.version = 11 : i64} {
  func.func @_disc_fwd_kernel(%arg0: i32, %arg1: memref<8x16xf32, #tpu.memory_space<vmem>>, %arg2: memref<16x256xbf16, #tpu.memory_space<vmem>>, %arg3: memref<1x256xf32, #tpu.memory_space<vmem>>, %arg4: memref<256x64xbf16, #tpu.memory_space<vmem>>, %arg5: memref<1x64xf32, #tpu.memory_space<vmem>>, %arg6: memref<64x8xbf16, #tpu.memory_space<vmem>>, %arg7: memref<1x8xf32, #tpu.memory_space<vmem>>, %arg8: memref<8x8xf32, #tpu.memory_space<vmem>>) attributes {dimension_semantics = [#tpu.dimension_semantics<parallel>], iteration_bounds = array<i64: 1>, scalar_prefetch = 0 : i64, scratch_operands = 0 : i64, tpu.core_type = #tpu.core_type<tc>, window_params = [{transform_indices = @transform_0, window_bounds = array<i64: 8, 16>}, {pipeline_mode = #tpu.pipeline_mode<synchronous>, transform_indices = @transform_1, window_bounds = array<i64: 16, 256>}, {pipeline_mode = #tpu.pipeline_mode<synchronous>, transform_indices = @transform_2, window_bounds = array<i64: 1, 256>}, {pipeline_mode = #tpu.pipeline_mode<synchronous>, transform_indices = @transform_3, window_bounds = array<i64: 256, 64>}, {pipeline_mode = #tpu.pipeline_mode<synchronous>, transform_indices = @transform_4, window_bounds = array<i64: 1, 64>}, {pipeline_mode = #tpu.pipeline_mode<synchronous>, transform_indices = @transform_5, window_bounds = array<i64: 64, 8>}, {pipeline_mode = #tpu.pipeline_mode<synchronous>, transform_indices = @transform_6, window_bounds = array<i64: 1, 8>}, {transform_indices = @transform_7, window_bounds = array<i64: 8, 8>}]} {
    %c0 = arith.constant 0 : index
    %c0_0 = arith.constant 0 : index
    %0 = vector.load %arg1[%c0, %c0_0] : memref<8x16xf32, #tpu.memory_space<vmem>>, vector<8x16xf32>
    %1 = arith.truncf %0 : vector<8x16xf32> to vector<8x16xbf16>
    %c0_1 = arith.constant 0 : index
    %c0_2 = arith.constant 0 : index
    %2 = vector.load %arg2[%c0_1, %c0_2] : memref<16x256xbf16, #tpu.memory_space<vmem>>, vector<16x256xbf16>
    %cst = arith.constant dense<0.000000e+00> : vector<8x256xf32>
    %3 = tpu.matmul %1, %2, %cst {dimension_numbers = #tpu.dot_dimension_numbers<[1], [0], [0], [1], [0, 0, 1, 1], [], []>} : vector<8x16xbf16>, vector<16x256xbf16>, vector<8x256xf32> -> vector<8x256xf32>
    %c0_3 = arith.constant 0 : index
    %c0_4 = arith.constant 0 : index
    %4 = vector.load %arg3[%c0_3, %c0_4] : memref<1x256xf32, #tpu.memory_space<vmem>>, vector<1x256xf32>
    %5 = vector.broadcast %4 : vector<1x256xf32> to vector<8x256xf32>
    %6 = arith.addf %3, %5 : vector<8x256xf32>
    %cst_5 = arith.constant 0.000000e+00 : f32
    %7 = vector.broadcast %cst_5 : f32 to vector<8x256xf32>
    %8 = arith.maximumf %6, %7 : vector<8x256xf32>
    %9 = arith.truncf %8 : vector<8x256xf32> to vector<8x256xbf16>
    %c0_6 = arith.constant 0 : index
    %c0_7 = arith.constant 0 : index
    %10 = vector.load %arg4[%c0_6, %c0_7] : memref<256x64xbf16, #tpu.memory_space<vmem>>, vector<256x64xbf16>
    %cst_8 = arith.constant dense<0.000000e+00> : vector<8x64xf32>
    %11 = tpu.matmul %9, %10, %cst_8 {dimension_numbers = #tpu.dot_dimension_numbers<[1], [0], [0], [1], [0, 0, 1, 1], [], []>} : vector<8x256xbf16>, vector<256x64xbf16>, vector<8x64xf32> -> vector<8x64xf32>
    %c0_9 = arith.constant 0 : index
    %c0_10 = arith.constant 0 : index
    %12 = vector.load %arg5[%c0_9, %c0_10] : memref<1x64xf32, #tpu.memory_space<vmem>>, vector<1x64xf32>
    %13 = vector.broadcast %12 : vector<1x64xf32> to vector<8x64xf32>
    %14 = arith.addf %11, %13 : vector<8x64xf32>
    %cst_11 = arith.constant 0.000000e+00 : f32
    %15 = vector.broadcast %cst_11 : f32 to vector<8x64xf32>
    %16 = arith.maximumf %14, %15 : vector<8x64xf32>
    %17 = arith.truncf %16 : vector<8x64xf32> to vector<8x64xbf16>
    %c0_12 = arith.constant 0 : index
    %c0_13 = arith.constant 0 : index
    %18 = vector.load %arg6[%c0_12, %c0_13] : memref<64x8xbf16, #tpu.memory_space<vmem>>, vector<64x8xbf16>
    %cst_14 = arith.constant dense<0.000000e+00> : vector<8x8xf32>
    %19 = tpu.matmul %17, %18, %cst_14 {dimension_numbers = #tpu.dot_dimension_numbers<[1], [0], [0], [1], [0, 0, 1, 1], [], []>} : vector<8x64xbf16>, vector<64x8xbf16>, vector<8x8xf32> -> vector<8x8xf32>
    %c0_15 = arith.constant 0 : index
    %c0_16 = arith.constant 0 : index
    %20 = vector.load %arg7[%c0_15, %c0_16] : memref<1x8xf32, #tpu.memory_space<vmem>>, vector<1x8xf32>
    %21 = vector.broadcast %20 : vector<1x8xf32> to vector<8x8xf32>
    %22 = arith.addf %19, %21 : vector<8x8xf32>
    %cst_17 = arith.constant dense<0xFF800000> : vector<8xf32>
    %23 = vector.multi_reduction <maximumf>, %22, %cst_17 [1] : vector<8x8xf32> to vector<8xf32>
    %24 = vector.shape_cast %23 : vector<8xf32> to vector<8x1xf32>
    %25 = vector.broadcast %24 : vector<8x1xf32> to vector<8x8xf32>
    %26 = arith.subf %22, %25 : vector<8x8xf32>
    %27 = math.exp %26 : vector<8x8xf32>
    %cst_18 = arith.constant dense<0.000000e+00> : vector<8xf32>
    %28 = vector.multi_reduction <add>, %27, %cst_18 [1] : vector<8x8xf32> to vector<8xf32>
    %29 = vector.shape_cast %28 : vector<8xf32> to vector<8x1xf32>
    %30 = tpu.reciprocal %29 : vector<8x1xf32> -> vector<8x1xf32>
    %31 = vector.broadcast %30 : vector<8x1xf32> to vector<8x8xf32>
    %32 = arith.mulf %27, %31 : vector<8x8xf32>
    %c0_19 = arith.constant 0 : index
    %c0_20 = arith.constant 0 : index
    %33 = vector.load %arg8[%c0_19, %c0_20] : memref<8x8xf32, #tpu.memory_space<vmem>>, vector<8x8xf32>
    tpu.vector_store %arg8[%c0_19, %c0_20], %32 {strides = array<i32>} : memref<8x8xf32, #tpu.memory_space<vmem>>, vector<8x8xf32>,
    return
  }
  func.func @transform_0(%arg0: i32) -> (i32, i32) {
    %c0_i32 = arith.constant 0 : i32
    %c0_i32_0 = arith.constant 0 : i32
    return %arg0, %c0_i32 : i32, i32
  }
  func.func @transform_1(%arg0: i32) -> (i32, i32) {
    %c0_i32 = arith.constant 0 : i32
    %c0_i32_0 = arith.constant 0 : i32
    %c0_i32_1 = arith.constant 0 : i32
    return %c0_i32, %c0_i32_0 : i32, i32
  }
  func.func @transform_2(%arg0: i32) -> (i32, i32) {
    %c0_i32 = arith.constant 0 : i32
    %c0_i32_0 = arith.constant 0 : i32
    %c0_i32_1 = arith.constant 0 : i32
    return %c0_i32, %c0_i32_0 : i32, i32
  }
  func.func @transform_3(%arg0: i32) -> (i32, i32) {
    %c0_i32 = arith.constant 0 : i32
    %c0_i32_0 = arith.constant 0 : i32
    %c0_i32_1 = arith.constant 0 : i32
    return %c0_i32, %c0_i32_0 : i32, i32
  }
  func.func @transform_4(%arg0: i32) -> (i32, i32) {
    %c0_i32 = arith.constant 0 : i32
    %c0_i32_0 = arith.constant 0 : i32
    %c0_i32_1 = arith.constant 0 : i32
    return %c0_i32, %c0_i32_0 : i32, i32
  }
  func.func @transform_5(%arg0: i32) -> (i32, i32) {
    %c0_i32 = arith.constant 0 : i32
    %c0_i32_0 = arith.constant 0 : i32
    %c0_i32_1 = arith.constant 0 : i32
    return %c0_i32, %c0_i32_0 : i32, i32
  }
  func.func @transform_6(%arg0: i32) -> (i32, i32) {
    %c0_i32 = arith.constant 0 : i32
    %c0_i32_0 = arith.constant 0 : i32
    %c0_i32_1 = arith.constant 0 : i32
    return %c0_i32, %c0_i32_0 : i32, i32
  }
  func.func @transform_7(%arg0: i32) -> (i32, i32) {
    %c0_i32 = arith.constant 0 : i32
    %c0_i32_0 = arith.constant 0 : i32
    return %arg0, %c0_i32 : i32, i32
  }
}

</mosaic_0001>

<llo_original>
// kernel: tpu_custom_call.1
$region0: #{tpu_custom_call.1}
  #allocation0 [shape = 'u32[]', space=smem, size = 0x4, offset = 0x4, fixed_abs, tag = 'smem constant byte address 0x4 - core index']
  #allocation1 [shape = 'u32[144,128]{1,0:T(1,128)}', space=vmem, size = 0x12000, scoped, tag = 'internal scratch']
  %s0 = inlined_call_operand.vmem [shape: f32[8,16], index: 0, kind: input, shape index: {}]
  %s1 = inlined_call_operand.vmem [shape: bf16[16,256], index: 1, kind: input, shape index: {}]
  %s2 = inlined_call_operand.vmem [shape: f32[1,256], index: 2, kind: input, shape index: {}]
  %s3 = inlined_call_operand.vmem [shape: bf16[256,64], index: 3, kind: input, shape index: {}]
  %s4 = inlined_call_operand.vmem [shape: f32[1,64], index: 4, kind: input, shape index: {}]
  %s5 = inlined_call_operand.vmem [shape: bf16[64,8], index: 5, kind: input, shape index: {}]
  %s6 = inlined_call_operand.vmem [shape: f32[1,8], index: 6, kind: input, shape index: {}]
  %s7 = inlined_call_operand.hbm [shape: f32[8,8], index: 7, kind: output, shape index: {}]
  %s8 = sld [smem:[#allocation0]]
  $region38: #{tpu_custom_call.1} parent=0
    _
  %s10 = ssub.s32 1, %s8
  %s11 = scalar_select 0, %s10, %s8
  $region1: #{tpu_custom_call.1} parent=0
    #allocation2 [shape = 'u8[4096]{0}', space=vmem, size = 0x1000, scoped, tag = 'output window, operand 0, single buffered']
    #allocation3 [shape = 's32[1]{0}', space=sflag, size = 0x4, scoped, tag = 'scoped memory for tpu_custom_call.1']
    %12 = vsyncpa [#allocation3], 0
    // Predicated region
    $region2: #{tpu_custom_call.1} parent=1 // pred_check
      _
    $region3: #{tpu_custom_call.1} parent=1 // pred_check_branch
      %14 = sbr.rel (0) target = $region5
    $region4: #{tpu_custom_call.1} parent=1 // pred_region
      _
    $region5: #{tpu_custom_call.1} parent=1 // pred_fallthru
      _
    // Predicated region
    $region6: #{tpu_custom_call.1} parent=1 // pred_check
      _
    $region7: #{tpu_custom_call.1} parent=1 // pred_check_branch
      %16 = sbr.rel (0) target = $region9
    $region8: #{tpu_custom_call.1} parent=1 // pred_region
      _
    $region9: #{tpu_custom_call.1} parent=1 // pred_fallthru
      _
    // Predicated region
    $region10: #{tpu_custom_call.1} parent=1 // pred_check
      _
    $region11: #{tpu_custom_call.1} parent=1 // pred_check_branch
      %18 = sbr.rel (0) target = $region13
    $region12: #{tpu_custom_call.1} parent=1 // pred_region
      _
    $region13: #{tpu_custom_call.1} parent=1 // pred_fallthru
      _
    // Predicated region
    $region14: #{tpu_custom_call.1} parent=1 // pred_check
      _
    $region15: #{tpu_custom_call.1} parent=1 // pred_check_branch
      %20 = sbr.rel (0) target = $region17
    $region16: #{tpu_custom_call.1} parent=1 // pred_region
      _
    $region17: #{tpu_custom_call.1} parent=1 // pred_fallthru
      _
    // Predicated region
    $region18: #{tpu_custom_call.1} parent=1 // pred_check
      _
    $region19: #{tpu_custom_call.1} parent=1 // pred_check_branch
      %22 = sbr.rel (0) target = $region21
    $region20: #{tpu_custom_call.1} parent=1 // pred_region
      _
    $region21: #{tpu_custom_call.1} parent=1 // pred_fallthru
      _
    // Predicated region
    $region22: #{tpu_custom_call.1} parent=1 // pred_check
      _
    $region23: #{tpu_custom_call.1} parent=1 // pred_check_branch
      %24 = sbr.rel (0) target = $region25
    $region24: #{tpu_custom_call.1} parent=1 // pred_region
      _
    $region25: #{tpu_custom_call.1} parent=1 // pred_fallthru
      _
    // Predicated region
    $region26: #{tpu_custom_call.1} parent=1 // pred_check
      _
    $region27: #{tpu_custom_call.1} parent=1 // pred_check_branch
      %26 = sbr.rel (0) target = $region29
    $region28: #{tpu_custom_call.1} parent=1 // pred_region
      _
    $region29: #{tpu_custom_call.1} parent=1 // pred_fallthru
      _
    %v28 = vld [vmem:[%s0] sm:$0xff]
    %v29 = vpack.c.bf16 %v28, %v28
    %v30 = vld [vmem:[%s1] sm:$0xff]
    %v31 = vld [vmem:[%s1 + $0x8] sm:$0xff]
    %v32 = vld [vmem:[%s2] sm:$0x3]
    %v34 = vlaneseq
    %v35 = vshrl.u32 %v34, 7
    %v36 = vsub.s32 0, %v35
    %v37 = vrot.slane %v32, %v36
    %v38 = vlaneseq
    %v39 = vshrl.u32 %v38, 7
    %v40 = vsub.s32 1, %v39
    %v41 = vrot.slane %v32, %v40
    %v46 = vunpack.c.l.b16 %v30
    %v47 = vunpack.c.h.b16 %v30
    %v48 = vunpack.c.l.b16 %v31
    %v49 = vunpack.c.h.b16 %v31
    %v50 = vpack.c.b16 %v48, %v46
    %v51 = vpack.c.b16 %v49, %v47
    %vm54 = vcmask 130048
    %v56 = vsel %vm54, %v29, 0
    %58 = vmatprep.subr.bf16.mxu0 %v51
    %59 = vmatpush1.bf16.msra.mxu0 %v50
    %60 = vmatprep.subr.bf16.mxu0 0
    %61 = vmatpush1.bf16.msra.mxu0 0
    %62 = vmatprep.subr.bf16.mxu0 0
    %63 = vmatpush1.bf16.msra.mxu0 0
    %64 = vmatprep.subr.bf16.mxu0 0
    %65 = vmatpush1.bf16.msra.mxu0 0
    %66 = vmatprep.subr.bf16.mxu0 0
    %67 = vmatpush1.bf16.msra.mxu0 0
    %68 = vmatprep.subr.bf16.mxu0 0
    %69 = vmatpush1.bf16.msra.mxu0 0
    %70 = vmatprep.subr.bf16.mxu0 0
    %71 = vmatpush1.bf16.msra.mxu0 0
    %72 = vmatprep.subr.bf16.mxu0 0
    %73 = vmatpush1.bf16.msra.mxu0 0
    %74 = vmatprep.subr.bf16.mxu0 0
    %75 = vmatpush1.bf16.msra.mxu0 0
    %76 = vmatprep.subr.bf16.mxu0 0
    %77 = vmatpush1.bf16.msra.mxu0 0
    %78 = vmatprep.subr.bf16.mxu0 0
    %79 = vmatpush1.bf16.msra.mxu0 0
    %80 = vmatprep.subr.bf16.mxu0 0
    %81 = vmatpush1.bf16.msra.mxu0 0
    %82 = vmatprep.subr.bf16.mxu0 0
    %83 = vmatpush1.bf16.msra.mxu0 0
    %84 = vmatprep.subr.bf16.mxu0 0
    %85 = vmatpush1.bf16.msra.mxu0 0
    %86 = vmatprep.subr.bf16.mxu0 0
    %87 = vmatpush1.bf16.msra.mxu0 0
    %88 = vmatprep.subr.bf16.mxu0 0
    %89 = vmatpush1.bf16.msra.mxu0 0
    %90 = vmatprep.mubr.bf16.mxu0 0
    %91 = vmatmul.mubr.bf16.gmra.mrb[0].mxu0 %v56
    %v92 = vpop.f32.mrb[0].mxu0
    %v93 = vadd.f32 %v37, %v92
    %v94 = vpop.f32.mrb[0].mxu0
    %v95 = vadd.f32 %v41, %v94
    %v96 = vpop.f32.mrb[0].mxu0
    %v97 = vpop.f32.mrb[0].mxu0
    %98 = vdwg.mxu0
    %v99 = vmax.f32 %v93, 0.0
    %v100 = vmax.f32 %v95, 0.0
    %v101 = vpack.c.bf16 %v99, %v99
    %v102 = vpack.c.bf16 %v100, %v100
    %v103 = vld [vmem:[%s3] sm:$0xf]
    %v104 = vld [vmem:[%s3 + $0x4] sm:$0xf]
    %v105 = vld [vmem:[%s3 + $0x8] sm:$0xf]
    %v106 = vld [vmem:[%s3 + $0xc] sm:$0xf]
    %v107 = vld [vmem:[%s3 + $0x10] sm:$0xf]
    %v108 = vld [vmem:[%s3 + $0x14] sm:$0xf]
    %v109 = vld [vmem:[%s3 + $0x18] sm:$0xf]
    %v110 = vld [vmem:[%s3 + $0x1c] sm:$0xf]
    %v111 = vld [vmem:[%s3 + $0x20] sm:$0xf]
    %v112 = vld [vmem:[%s3 + $0x24] sm:$0xf]
    %v113 = vld [vmem:[%s3 + $0x28] sm:$0xf]
    %v114 = vld [vmem:[%s3 + $0x2c] sm:$0xf]
    %v115 = vld [vmem:[%s3 + $0x30] sm:$0xf]
    %v116 = vld [vmem:[%s3 + $0x34] sm:$0xf]
    %v117 = vld [vmem:[%s3 + $0x38] sm:$0xf]
    %v118 = vld [vmem:[%s3 + $0x3c] sm:$0xf]
    %v119 = vld [vmem:[%s3 + $0x40] sm:$0xf]
    %v120 = vld [vmem:[%s3 + $0x44] sm:$0xf]
    %v121 = vld [vmem:[%s3 + $0x48] sm:$0xf]
    %v122 = vld [vmem:[%s3 + $0x4c] sm:$0xf]
    %v123 = vld [vmem:[%s3 + $0x50] sm:$0xf]
    %v124 = vld [vmem:[%s3 + $0x54] sm:$0xf]
    %v125 = vld [vmem:[%s3 + $0x58] sm:$0xf]
    %v126 = vld [vmem:[%s3 + $0x5c] sm:$0xf]
    %v127 = vld [vmem:[%s3 + $0x60] sm:$0xf]
    %v128 = vld [vmem:[%s3 + $0x64] sm:$0xf]
    %v129 = vld [vmem:[%s3 + $0x68] sm:$0xf]
    %v130 = vld [vmem:[%s3 + $0x6c] sm:$0xf]
    %v131 = vld [vmem:[%s3 + $0x70] sm:$0xf]
    %v132 = vld [vmem:[%s3 + $0x74] sm:$0xf]
    %v133 = vld [vmem:[%s3 + $0x78] sm:$0xf]
    %v134 = vld [vmem:[%s3 + $0x7c] sm:$0xf]
    %v135 = vld [vmem:[%s4] sm:$0x1]
    %v137 = vlaneseq
    %v138 = vshrl.u32 %v137, 7
    %v139 = vsub.s32 0, %v138
    %v140 = vrot.slane %v135, %v139
    %v174 = vunpack.c.l.b16 %v103
    %v175 = vunpack.c.l.b16 %v104
    %v176 = vunpack.c.l.b16 %v105
    %v177 = vunpack.c.l.b16 %v106
    %v178 = vunpack.c.l.b16 %v107
    %v179 = vunpack.c.l.b16 %v108
    %v180 = vunpack.c.l.b16 %v109
    %v181 = vunpack.c.l.b16 %v110
    %v182 = vunpack.c.l.b16 %v111
    %v183 = vunpack.c.l.b16 %v112
    %v184 = vunpack.c.l.b16 %v113
    %v185 = vunpack.c.l.b16 %v114
    %v186 = vunpack.c.l.b16 %v115
    %v187 = vunpack.c.l.b16 %v116
    %v188 = vunpack.c.l.b16 %v117
    %v189 = vunpack.c.l.b16 %v118
    %v190 = vunpack.c.l.b16 %v119
    %v191 = vunpack.c.l.b16 %v120
    %v192 = vunpack.c.l.b16 %v121
    %v193 = vunpack.c.l.b16 %v122
    %v194 = vunpack.c.l.b16 %v123
    %v195 = vunpack.c.l.b16 %v124
    %v196 = vunpack.c.l.b16 %v125
    %v197 = vunpack.c.l.b16 %v126
    %v198 = vunpack.c.l.b16 %v127
    %v199 = vunpack.c.l.b16 %v128
    %v200 = vunpack.c.l.b16 %v129
    %v201 = vunpack.c.l.b16 %v130
    %v202 = vunpack.c.l.b16 %v131
    %v203 = vunpack.c.l.b16 %v132
    %v204 = vunpack.c.l.b16 %v133
    %v205 = vunpack.c.l.b16 %v134
    %v206 = vpack.c.b16 %v175, %v174
    %v207 = vpack.c.b16 %v177, %v176
    %v208 = vpack.c.b16 %v179, %v178
    %v209 = vpack.c.b16 %v181, %v180
    %v210 = vpack.c.b16 %v183, %v182
    %v211 = vpack.c.b16 %v185, %v184
    %v212 = vpack.c.b16 %v187, %v186
    %v213 = vpack.c.b16 %v189, %v188
    %v214 = vpack.c.b16 %v191, %v190
    %v215 = vpack.c.b16 %v193, %v192
    %v216 = vpack.c.b16 %v195, %v194
    %v217 = vpack.c.b16 %v197, %v196
    %v218 = vpack.c.b16 %v199, %v198
    %v219 = vpack.c.b16 %v201, %v200
    %v220 = vpack.c.b16 %v203, %v202
    %v221 = vpack.c.b16 %v205, %v204
    %238 = vmatprep.subr.bf16.mxu0 0
    %239 = vmatpush1.bf16.msra.mxu0 %v206
    %240 = vmatprep.subr.bf16.mxu0 0
    %241 = vmatpush1.bf16.msra.mxu0 %v207
    %242 = vmatprep.subr.bf16.mxu0 0
    %243 = vmatpush1.bf16.msra.mxu0 %v208
    %244 = vmatprep.subr.bf16.mxu0 0
    %245 = vmatpush1.bf16.msra.mxu0 %v209
    %246 = vmatprep.subr.bf16.mxu0 0
    %247 = vmatpush1.bf16.msra.mxu0 %v210
    %248 = vmatprep.subr.bf16.mxu0 0
    %249 = vmatpush1.bf16.msra.mxu0 %v211
    %250 = vmatprep.subr.bf16.mxu0 0
    %251 = vmatpush1.bf16.msra.mxu0 %v212
    %252 = vmatprep.subr.bf16.mxu0 0
    %253 = vmatpush1.bf16.msra.mxu0 %v213
    %254 = vmatprep.subr.bf16.mxu0 0
    %255 = vmatpush1.bf16.msra.mxu0 %v214
    %256 = vmatprep.subr.bf16.mxu0 0
    %257 = vmatpush1.bf16.msra.mxu0 %v215
    %258 = vmatprep.subr.bf16.mxu0 0
    %259 = vmatpush1.bf16.msra.mxu0 %v216
    %260 = vmatprep.subr.bf16.mxu0 0
    %261 = vmatpush1.bf16.msra.mxu0 %v217
    %262 = vmatprep.subr.bf16.mxu0 0
    %263 = vmatpush1.bf16.msra.mxu0 %v218
    %264 = vmatprep.subr.bf16.mxu0 0
    %265 = vmatpush1.bf16.msra.mxu0 %v219
    %266 = vmatprep.subr.bf16.mxu0 0
    %267 = vmatpush1.bf16.msra.mxu0 %v220
    %268 = vmatprep.subr.bf16.mxu0 0
    %269 = vmatpush1.bf16.msra.mxu0 %v221
    %270 = vmatprep.mubr.bf16.mxu0 %v102
    %271 = vmatmul.mubr.bf16.gmra.mrb[0].mxu0 %v101
    %v272 = vpop.f32.mrb[0].mxu0
    %v273 = vadd.f32 %v140, %v272
    %v274 = vpop.f32.mrb[0].mxu0
    %v275 = vpop.f32.mrb[0].mxu0
    %v276 = vpop.f32.mrb[0].mxu0
    %277 = vdwg.mxu0
    %v278 = vmax.f32 %v273, 0.0
    %v279 = vpack.c.bf16 %v278, %v278
    %v280 = vld [vmem:[%s5] sm:$0xf]
    %v281 = vld [vmem:[%s5 + $0x4] sm:$0xf]
    %v282 = vld [vmem:[%s5 + $0x8] sm:$0xf]
    %v283 = vld [vmem:[%s5 + $0xc] sm:$0xf]
    %v284 = vld [vmem:[%s5 + $0x10] sm:$0xf]
    %v285 = vld [vmem:[%s5 + $0x14] sm:$0xf]
    %v286 = vld [vmem:[%s5 + $0x18] sm:$0xf]
    %v287 = vld [vmem:[%s5 + $0x1c] sm:$0xf]
    %v288 = vld [vmem:[%s6] sm:$0x1]
    %v290 = vlaneseq
    %v291 = vshrl.u32 %v290, 7
    %v292 = vsub.s32 0, %v291
    %v293 = vrot.slane %v288, %v292
    %v303 = vunpack.c.l.b16 %v280
    %v304 = vunpack.c.l.b16 %v281
    %v305 = vunpack.c.l.b16 %v282
    %v306 = vunpack.c.l.b16 %v283
    %v307 = vunpack.c.l.b16 %v284
    %v308 = vunpack.c.l.b16 %v285
    %v309 = vunpack.c.l.b16 %v286
    %v310 = vunpack.c.l.b16 %v287
    %v311 = vpack.c.b16 %v304, %v303
    %v312 = vpack.c.b16 %v306, %v305
    %v313 = vpack.c.b16 %v308, %v307
    %v314 = vpack.c.b16 %v310, %v309
    %vm319 = vcmask 523264
    %v321 = vsel %vm319, %v279, 0
    %323 = vmatprep.subr.bf16.mxu0 0
    %324 = vmatpush1.bf16.msra.mxu0 %v311
    %325 = vmatprep.subr.bf16.mxu0 0
    %326 = vmatpush1.bf16.msra.mxu0 %v312
    %327 = vmatprep.subr.bf16.mxu0 0
    %328 = vmatpush1.bf16.msra.mxu0 %v313
    %329 = vmatprep.subr.bf16.mxu0 0
    %330 = vmatpush1.bf16.msra.mxu0 %v314
    %331 = vmatprep.subr.bf16.mxu0 0
    %332 = vmatpush1.bf16.msra.mxu0 0
    %333 = vmatprep.subr.bf16.mxu0 0
    %334 = vmatpush1.bf16.msra.mxu0 0
    %335 = vmatprep.subr.bf16.mxu0 0
    %336 = vmatpush1.bf16.msra.mxu0 0
    %337 = vmatprep.subr.bf16.mxu0 0
    %338 = vmatpush1.bf16.msra.mxu0 0
    %339 = vmatprep.subr.bf16.mxu0 0
    %340 = vmatpush1.bf16.msra.mxu0 0
    %341 = vmatprep.subr.bf16.mxu0 0
    %342 = vmatpush1.bf16.msra.mxu0 0
    %343 = vmatprep.subr.bf16.mxu0 0
    %344 = vmatpush1.bf16.msra.mxu0 0
    %345 = vmatprep.subr.bf16.mxu0 0
    %346 = vmatpush1.bf16.msra.mxu0 0
    %347 = vmatprep.subr.bf16.mxu0 0
    %348 = vmatpush1.bf16.msra.mxu0 0
    %349 = vmatprep.subr.bf16.mxu0 0
    %350 = vmatpush1.bf16.msra.mxu0 0
    %351 = vmatprep.subr.bf16.mxu0 0
    %352 = vmatpush1.bf16.msra.mxu0 0
    %353 = vmatprep.subr.bf16.mxu0 0
    %354 = vmatpush1.bf16.msra.mxu0 0
    %355 = vmatprep.mubr.bf16.mxu0 0
    %356 = vmatmul.mubr.bf16.gmra.mrb[0].mxu0 %v321
    %v357 = vpop.f32.mrb[0].mxu0
    %v358 = vadd.f32 %v293, %v357
    %v359 = vpop.f32.mrb[0].mxu0
    %v360 = vpop.f32.mrb[0].mxu0
    %v361 = vpop.f32.mrb[0].mxu0
    %362 = vdwg.mxu0
    %vm363 = vcmask 64512
    %v364 = vsel %vm363, %v358, -inf
    %365 = vmax.xlane.f32.xlu0 %v364
    %v366 = vpop.xlane.xlu0 %365
    %v367 = vsub.f32 %v358, %v366
    %v368 = vmul.f32 %v367, 1.442695
    %v369 = vpow.pop %v368
    %v370 = vsel %vm363, %v369, 0.0
    %371 = vadd.xlane.f32.xlu0 %v370
    %v372 = vpop.xlane.xlu0 %371
    %v373 = vrcp.pop %v372
    %v374 = vmul.f32 %v369, %v373
    %375 = vst.msk [vmem:[#allocation2] sm:$0xff] %vm363, %v374
    // Predicated region
    $region30: #{tpu_custom_call.1} parent=1 // pred_check
      _
    $region31: #{tpu_custom_call.1} parent=1 // pred_check_branch
      %377 = sbr.rel (0) target = $region33
    $region32: #{tpu_custom_call.1} parent=1 // pred_region
      %s379 = ssub.s32 128, 128
      %380 = vsyncadd [#allocation3], %s379
      %s382 = sshll.u32 [#allocation2], 4
      %s383 = int_to_ptr.vmem [resolvable:$true] %s382
      %385 = dma.vmem_to_hbm [thread:$0]  %s383, 128, %s7, [#allocation3]
    $region33: #{tpu_custom_call.1} parent=1 // pred_fallthru
      _
    // Predicated region
    $region34: #{tpu_custom_call.1} parent=1 // pred_check
      _
    $region35: #{tpu_custom_call.1} parent=1 // pred_check_branch
      %387 = sbr.rel (0) target = $region37
    $region36: #{tpu_custom_call.1} parent=1 // pred_region
      %388 = dma.done [#allocation3], 128
    $region37: #{tpu_custom_call.1} parent=1 // pred_fallthru
      _
    %389 = vsyncpa [#allocation3], 1

</llo_original>
